<compile_context>
chip_gen: v7x
topology: tpu7x:2x2x1
jax: 0.10.0
libtpu: 0.0.40
codegen_flags: <defaults>
</compile_context>

<pallas_src>
import jax
import jax.numpy as jnp
from jax import lax
from jax.experimental import pallas as pl
from jax.experimental.pallas import tpu as pltpu

# ----- "args" (synthetic config implied by the module's __init__) -----------
VOCAB_SIZE = 64        # args.vocab_size
EMBED_DIM = 32         # args.embedding_size
USE_EMBEDDING_FC = True
DROPOUT_P = 0.1        # nn.Dropout: identity in eval mode
MAX_ROW_TILE = 2048    # packed rows per grid step (= 2048 * (128//H) tokens)
STRIP = 128            # packed rows per inner (in-register) strip


def _round_up(x, m):
    return ((x + m - 1) // m) * m


def encoder_gather_kernel(idx_ref, tbl_ref, spread_ref, out_ref):
    """Packed embedding gather for one tile of packed token rows.

    idx_ref:    (row_tile, PACK)      f32  token ids with +j*V slot offsets folded in
    tbl_ref:    (PACK*V, PACK*H)      f32  block-diagonal replicated lookup table
    spread_ref: (PACK, PACK*V)        f32  spread[j, c] = 1.0 iff c // V == j
    out_ref:    (row_tile, PACK*H)    f32  lane-dense packed output (128 lanes)
    """
    row_tile, _pack = idx_ref.shape
    cols = tbl_ref.shape[0]                       # PACK * V
    strip = min(STRIP, row_tile)
    n_strips = row_tile // strip                  # row_tile is a multiple of strip

    def body(s, carry):
        r0 = pl.multiple_of(s * strip, strip)
        ids = idx_ref[pl.ds(r0, strip), :]                        # (strip, PACK)

        # Per-column comparand built on the (otherwise idle) MXU:
        #   idspread[r, c] = ids[r, c // V]   (exact: small integers, 0/1 weights)
        idspread = jnp.dot(ids, spread_ref[...],
                           preferred_element_type=jnp.float32)    # (strip, cols)

        # Single compare per element -> one-hot (offsets already folded into ids).
        colc = lax.broadcasted_iota(jnp.int32, (strip, cols), 1).astype(jnp.float32)
        onehot = (idspread == colc).astype(jnp.float32)           # (strip, cols)

        # MXU gather+placement: picks table rows into the right lane blocks.
        out_ref[pl.ds(r0, strip), :] = jnp.dot(
            onehot, tbl_ref[...], preferred_element_type=jnp.float32)
        return carry

    lax.fori_loop(0, n_strips, body, None, unroll=True)


def abstract_encoder_forward(x_indx_char, x_indx_word, params):
    """Mirrors AbstractEncoder.forward.  Index inputs are (B, 1, S) int32."""
    x_indx = x_indx_char if x_indx_char is not None else x_indx_word
    idx = x_indx[:, 0, :]                          # .squeeze(1) -> (B, S)
    B, S = idx.shape
    N = B * S

    emb = params["embedding"]                      # (V, H)
    V, H = emb.shape
    assert 128 % H == 0, "H must divide 128 for the packed-lane layout"
    PACK = 128 // H                                # tokens per 128-lane row
    # NOTE: the one-hot-matmul gather is O(PACK*V) per token; only viable for a
    # tiny vocabulary.  A realistic vocab needs a scalar-prefetch / DMA gather.
    assert PACK * V <= 2048, "one-hot gather only viable for tiny vocabularies"

    # --- fold embedding + embedding_fc + ReLU into one (V, H) table ---------
    if USE_EMBEDDING_FC:
        table = jnp.maximum(
            jnp.dot(emb, params["emb_fc_w"].T) + params["emb_fc_b"], 0.0)
        # TODO(synk): training-mode dropout (pltpu.prng_seed + stateful_bernoulli)
        # omitted; nn.Dropout is identity in eval mode.
    else:
        table = emb

    # Block-diagonal replicated table: tbl_p[j*V + v, j*H:(j+1)*H] = table[v].
    eye = jnp.eye(PACK, dtype=table.dtype)
    tbl_p = jnp.einsum("vh,jk->jvkh", table, eye).reshape(PACK * V, PACK * H)

    # Spread matrix for the in-kernel comparand matmul: spread[j, c] = (c//V == j).
    slot = jnp.arange(PACK, dtype=jnp.int32)
    col_slot = jnp.arange(PACK * V, dtype=jnp.int32) // V
    spread = (slot[:, None] == col_slot[None, :]).astype(jnp.float32)

    # --- tile-size selection -------------------------------------------------
    rows = pl.cdiv(N, PACK)                        # packed rows of PACK tokens
    # Aim for >=2 grid steps (v7x: both TensorCores), cap at MAX_ROW_TILE, keep
    # row_tile a multiple of the strip size (128) when large, of 8 when small.
    target = max(8, _round_up(pl.cdiv(rows, 2), 8))
    if target > STRIP:
        row_tile = min(MAX_ROW_TILE, (target // STRIP) * STRIP)
    else:
        row_tile = target
    rows_pad = pl.cdiv(rows, row_tile) * row_tile

    # --- pad token stream to whole packed-row tiles ---------------------------
    idx_flat = idx.reshape(-1).astype(jnp.int32)
    idx_pad = jnp.zeros((rows_pad * PACK,), jnp.int32).at[:N].set(idx_flat)
    # Fold per-slot +j*V offsets here (kernel then needs a single compare), and
    # pre-cast to f32 so the ids feed the MXU spread-matmul directly.
    idx_pk = (idx_pad.reshape(rows_pad, PACK) + (slot * V)[None, :]).astype(
        jnp.float32)

    grid = (rows_pad // row_tile,)
    out_packed = pl.pallas_call(
        encoder_gather_kernel,
        out_shape=jax.ShapeDtypeStruct((rows_pad, PACK * H), jnp.float32),
        grid_spec=pltpu.PrefetchScalarGridSpec(
            num_scalar_prefetch=0,
            grid=grid,
            in_specs=[
                pl.BlockSpec((row_tile, PACK), lambda i: (i, 0)),       # ids
                pl.BlockSpec((PACK * V, PACK * H), lambda i: (0, 0)),   # table
                pl.BlockSpec((PACK, PACK * V), lambda i: (0, 0)),       # spread
            ],
            out_specs=pl.BlockSpec((row_tile, PACK * H), lambda i: (i, 0)),
        ),
        compiler_params=pltpu.CompilerParams(
            dimension_semantics=("parallel",)),
    )(idx_pk, tbl_p, spread)

    # (rows_pad, PACK*H) row-major == (rows_pad*PACK, H); drop padding, reshape.
    # Note: the padded tail rows contain table[0] garbage by construction; they
    # are sliced off here and must not be consumed unsliced.
    return out_packed.reshape(-1, H)[:N].reshape(B, S, H)


def reference_forward(x_indx_word, params):
    idx = x_indx_word[:, 0, :]
    x = params["embedding"][idx]                                   # (B,S,H)
    if USE_EMBEDDING_FC:
        y = jnp.einsum("bsh,oh->bso", x, params["emb_fc_w"]) + params["emb_fc_b"]
        return jnp.maximum(y, 0.0)
    return x


if __name__ == "__main__":
    key = jax.random.PRNGKey(0)
    k_emb, k_w, k_b, k_idx1, k_idx2 = jax.random.split(key, 5)

    # Deterministic synthetic parameters (shapes from __init__).
    params = {
        "embedding": jax.random.normal(k_emb, (VOCAB_SIZE, EMBED_DIM),
                                       jnp.float32) * 0.1,
        "emb_fc_w": jax.random.normal(k_w, (EMBED_DIM, EMBED_DIM),
                                      jnp.float32) * 0.1,   # (out, in) like nn.Linear
        "emb_fc_b": jax.random.normal(k_b, (EMBED_DIM,), jnp.float32) * 0.1,
    }

    # Small primary case (single grid step, single strip).
    B, S = 2, 8
    x_indx_word = jax.random.randint(k_idx1, (B, 1, S), 0, VOCAB_SIZE, jnp.int32)
    out = abstract_encoder_forward(None, x_indx_word, params)
    out = jax.block_until_ready(out)
    ref = reference_forward(x_indx_word, params)
    assert out.shape == (B, S, EMBED_DIM)
    assert jnp.allclose(out, ref, atol=1e-5, rtol=1e-5), "mismatch vs reference"

    # Secondary case exercising the strip loop and a multi-step grid
    # (rows=512 -> row_tile=256, 2 strips per step, 2 grid steps).
    B2, S2 = 4, 512
    x_indx_word2 = jax.random.randint(k_idx2, (B2, 1, S2), 0, VOCAB_SIZE, jnp.int32)
    out2 = abstract_encoder_forward(None, x_indx_word2, params)
    out2 = jax.block_until_ready(out2)
    ref2 = reference_forward(x_indx_word2, params)
    assert out2.shape == (B2, S2, EMBED_DIM)
    assert jnp.allclose(out2, ref2, atol=1e-5, rtol=1e-5), "mismatch vs reference (tiled)"

    print("KERNEL_OK")
</pallas_src>

<mosaic_0001>
module attributes {stable_mosaic.version = 11 : i64} {
  func.func @encoder_gather_kernel(%arg0: i32, %arg1: memref<8x4xf32, #tpu.memory_space<vmem>>, %arg2: memref<256x128xf32, #tpu.memory_space<vmem>>, %arg3: memref<4x256xf32, #tpu.memory_space<vmem>>, %arg4: memref<8x128xf32, #tpu.memory_space<vmem>>) attributes {dimension_semantics = [#tpu.dimension_semantics<parallel>], iteration_bounds = array<i64: 1>, scalar_prefetch = 0 : i64, scratch_operands = 0 : i64, tpu.core_type = #tpu.core_type<tc>, window_params = [{transform_indices = @transform_0, window_bounds = array<i64: 8, 4>}, {pipeline_mode = #tpu.pipeline_mode<synchronous>, transform_indices = @transform_1, window_bounds = array<i64: 256, 128>}, {pipeline_mode = #tpu.pipeline_mode<synchronous>, transform_indices = @transform_2, window_bounds = array<i64: 4, 256>}, {transform_indices = @transform_3, window_bounds = array<i64: 8, 128>}]} {
    %c0_i32 = arith.constant 0 : i32
    %c8_i32 = arith.constant 8 : i32
    %0 = arith.muli %c0_i32, %c8_i32 : i32
    %1 = tpu.assume_multiple %0, 8 : i32
    %2 = arith.index_cast %1 : i32 to index
    %c0 = arith.constant 0 : index
    %3 = vector.load %arg1[%2, %c0] : memref<8x4xf32, #tpu.memory_space<vmem>>, vector<8x4xf32>
    %c0_0 = arith.constant 0 : index
    %c0_1 = arith.constant 0 : index
    %4 = vector.load %arg3[%c0_0, %c0_1] : memref<4x256xf32, #tpu.memory_space<vmem>>, vector<4x256xf32>
    %cst = arith.constant dense<0.000000e+00> : vector<8x256xf32>
    %5 = tpu.matmul %3, %4, %cst {dimension_numbers = #tpu.dot_dimension_numbers<[1], [0], [0], [1], [0, 0, 1, 1], [], []>} : vector<8x4xf32>, vector<4x256xf32>, vector<8x256xf32> -> vector<8x256xf32>
    %6 = tpu.iota {dimensions = array<i32: 1>} : vector<8x256xi32>
    %7 = arith.sitofp %6 : vector<8x256xi32> to vector<8x256xf32>
    %8 = arith.cmpf oeq, %5, %7 : vector<8x256xf32>
    %9 = arith.extui %8 : vector<8x256xi1> to vector<8x256xi32>
    %10 = arith.sitofp %9 : vector<8x256xi32> to vector<8x256xf32>
    %c0_2 = arith.constant 0 : index
    %c0_3 = arith.constant 0 : index
    %11 = vector.load %arg2[%c0_2, %c0_3] : memref<256x128xf32, #tpu.memory_space<vmem>>, vector<256x128xf32>
    %cst_4 = arith.constant dense<0.000000e+00> : vector<8x128xf32>
    %12 = tpu.matmul %10, %11, %cst_4 {dimension_numbers = #tpu.dot_dimension_numbers<[1], [0], [0], [1], [0, 0, 1, 1], [], []>} : vector<8x256xf32>, vector<256x128xf32>, vector<8x128xf32> -> vector<8x128xf32>
    %13 = arith.index_cast %1 : i32 to index
    %c0_5 = arith.constant 0 : index
    %14 = vector.load %arg4[%13, %c0_5] : memref<8x128xf32, #tpu.memory_space<vmem>>, vector<8x128xf32>
    tpu.vector_store %arg4[%13, %c0_5], %12 {strides = array<i32>} : memref<8x128xf32, #tpu.memory_space<vmem>>, vector<8x128xf32>,
    %c1_i32 = arith.constant 1 : i32
    return
  }
  func.func @transform_0(%arg0: i32) -> (i32, i32) {
    %c0_i32 = arith.constant 0 : i32
    %c0_i32_0 = arith.constant 0 : i32
    return %arg0, %c0_i32 : i32, i32
  }
  func.func @transform_1(%arg0: i32) -> (i32, i32) {
    %c0_i32 = arith.constant 0 : i32
    %c0_i32_0 = arith.constant 0 : i32
    %c0_i32_1 = arith.constant 0 : i32
    return %c0_i32, %c0_i32_0 : i32, i32
  }
  func.func @transform_2(%arg0: i32) -> (i32, i32) {
    %c0_i32 = arith.constant 0 : i32
    %c0_i32_0 = arith.constant 0 : i32
    %c0_i32_1 = arith.constant 0 : i32
    return %c0_i32, %c0_i32_0 : i32, i32
  }
  func.func @transform_3(%arg0: i32) -> (i32, i32) {
    %c0_i32 = arith.constant 0 : i32
    %c0_i32_0 = arith.constant 0 : i32
    return %arg0, %c0_i32 : i32, i32
  }
}

</mosaic_0001>

<llo_original>
// kernel: tpu_custom_call.1
$region0: #{tpu_custom_call.1}
  #allocation0 [shape = 'u32[]', space=smem, size = 0x4, offset = 0x4, fixed_abs, tag = 'smem constant byte address 0x4 - core index']
  #allocation1 [shape = 'u32[144,128]{1,0:T(1,128)}', space=vmem, size = 0x12000, scoped, tag = 'internal scratch']
  %s0 = inlined_call_operand.vmem [shape: f32[8,4], index: 0, kind: input, shape index: {}]
  %s1 = inlined_call_operand.hbm [shape: f32[256,128], index: 1, kind: input, shape index: {}]
  %s2 = inlined_call_operand.vmem [shape: f32[4,256], index: 2, kind: input, shape index: {}]
  %s3 = inlined_call_operand.hbm [shape: f32[8,128], index: 3, kind: output, shape index: {}]
  %s4 = sld [smem:[#allocation0]]
  $region26: #{tpu_custom_call.1} parent=0
    _
  %s6 = ssub.s32 1, %s4
  %s7 = scalar_select 0, %s6, %s4
  $region1: #{tpu_custom_call.1} parent=0
    #allocation2 [shape = 'u8[131072]{0}', space=vmem, size = 0x20000, scoped, tag = 'input window, operand 1, single buffered']
    #allocation3 [shape = 's32[1]{0}', space=sflag, size = 0x4, scoped, tag = 'scoped memory for tpu_custom_call.1']
    #allocation4 [shape = 's32[1]{0}', space=sflag, size = 0x4, scoped, tag = 'scoped memory for tpu_custom_call.1']
    #allocation5 [shape = 'u8[4096]{0}', space=vmem, size = 0x1000, scoped, tag = 'output window, operand 0, single buffered']
    %8 = vsyncpa [#allocation3], 0
    %9 = vsyncpa [#allocation4], 0
    // Predicated region
    $region2: #{tpu_custom_call.1} parent=1 // pred_check
      _
    $region3: #{tpu_custom_call.1} parent=1 // pred_check_branch
      %11 = sbr.rel (0) target = $region5
    $region4: #{tpu_custom_call.1} parent=1 // pred_region
      _
    $region5: #{tpu_custom_call.1} parent=1 // pred_fallthru
      _
    // Predicated region
    $region6: #{tpu_custom_call.1} parent=1 // pred_check
      _
    $region7: #{tpu_custom_call.1} parent=1 // pred_check_branch
      %13 = sbr.rel (0) target = $region9
    $region8: #{tpu_custom_call.1} parent=1 // pred_region
      %s15 = ssub.s32 4096, 4096
      %16 = vsyncadd [#allocation3], %s15
      %s17 = sshll.u32 [#allocation2], 4
      %s18 = int_to_ptr.vmem [resolvable:$true] %s17
      %23 = dma.hbm_to_vmem [thread:$0]  %s1, 4096, %s18, [#allocation3], 128, 128, 8
    $region9: #{tpu_custom_call.1} parent=1 // pred_fallthru
      _
    // Predicated region
    $region10: #{tpu_custom_call.1} parent=1 // pred_check
      _
    $region11: #{tpu_custom_call.1} parent=1 // pred_check_branch
      %25 = sbr.rel (0) target = $region13
    $region12: #{tpu_custom_call.1} parent=1 // pred_region
      _
    $region13: #{tpu_custom_call.1} parent=1 // pred_fallthru
      _
    // Predicated region
    $region14: #{tpu_custom_call.1} parent=1 // pred_check
      _
    $region15: #{tpu_custom_call.1} parent=1 // pred_check_branch
      %27 = sbr.rel (0) target = $region17
    $region16: #{tpu_custom_call.1} parent=1 // pred_region
      %28 = dma.done [#allocation3], 4096
    $region17: #{tpu_custom_call.1} parent=1 // pred_fallthru
      _
    %v29 = vld [vmem:[%s0] sm:$0xff]
    %v30 = vld [vmem:[%s2] sm:$0xff]
    %v32 = vcombine.high %v30, %v30
    %vm33 = vcmask 31744
    %v35 = vsel %vm33, %v29, 0
    %vm37 = vcmask 1043456
    %v38 = vsel %vm37, %v30, 0
    %v40 = vsel %vm37, %v32, 0
    %42 = vmatprep.subr.mxu0 %v40
    %43 = vmatpush1.msra.mxu0 %v38
    %44 = vmatprep.subr.mxu0 0.0
    %45 = vmatpush1.msra.mxu0 0.0
    %46 = vmatprep.subr.mxu0 0.0
    %47 = vmatpush1.msra.mxu0 0.0
    %48 = vmatprep.subr.mxu0 0.0
    %49 = vmatpush1.msra.mxu0 0.0
    %50 = vmatprep.subr.mxu0 0.0
    %51 = vmatpush1.msra.mxu0 0.0
    %52 = vmatprep.subr.mxu0 0.0
    %53 = vmatpush1.msra.mxu0 0.0
    %54 = vmatprep.subr.mxu0 0.0
    %55 = vmatpush1.msra.mxu0 0.0
    %56 = vmatprep.subr.mxu0 0.0
    %57 = vmatpush1.msra.mxu0 0.0
    %58 = vmatprep.subr.mxu0 0.0
    %59 = vmatpush1.msra.mxu0 0.0
    %60 = vmatprep.subr.mxu0 0.0
    %61 = vmatpush1.msra.mxu0 0.0
    %62 = vmatprep.subr.mxu0 0.0
    %63 = vmatpush1.msra.mxu0 0.0
    %64 = vmatprep.subr.mxu0 0.0
    %65 = vmatpush1.msra.mxu0 0.0
    %66 = vmatprep.subr.mxu0 0.0
    %67 = vmatpush1.msra.mxu0 0.0
    %68 = vmatprep.subr.mxu0 0.0
    %69 = vmatpush1.msra.mxu0 0.0
    %70 = vmatprep.subr.mxu0 0.0
    %71 = vmatpush1.msra.mxu0 0.0
    %72 = vmatprep.subr.mxu0 0.0
    %73 = vmatpush1.msra.mxu0 0.0
    %74 = vmatprep.subr.mxu0 0.0
    %75 = vmatpush1.msra.mxu0 0.0
    %76 = vmatprep.subr.mxu0 0.0
    %77 = vmatpush1.msra.mxu0 0.0
    %78 = vmatprep.subr.mxu0 0.0
    %79 = vmatpush1.msra.mxu0 0.0
    %80 = vmatprep.subr.mxu0 0.0
    %81 = vmatpush1.msra.mxu0 0.0
    %82 = vmatprep.subr.mxu0 0.0
    %83 = vmatpush1.msra.mxu0 0.0
    %84 = vmatprep.subr.mxu0 0.0
    %85 = vmatpush1.msra.mxu0 0.0
    %86 = vmatprep.subr.mxu0 0.0
    %87 = vmatpush1.msra.mxu0 0.0
    %88 = vmatprep.subr.mxu0 0.0
    %89 = vmatpush1.msra.mxu0 0.0
    %90 = vmatprep.subr.mxu0 0.0
    %91 = vmatpush1.msra.mxu0 0.0
    %92 = vmatprep.subr.mxu0 0.0
    %93 = vmatpush1.msra.mxu0 0.0
    %94 = vmatprep.subr.mxu0 0.0
    %95 = vmatpush1.msra.mxu0 0.0
    %96 = vmatprep.subr.mxu0 0.0
    %97 = vmatpush1.msra.mxu0 0.0
    %98 = vmatprep.subr.mxu0 0.0
    %99 = vmatpush1.msra.mxu0 0.0
    %100 = vmatprep.subr.mxu0 0.0
    %101 = vmatpush1.msra.mxu0 0.0
    %102 = vmatprep.subr.mxu0 0.0
    %103 = vmatpush1.msra.mxu0 0.0
    %104 = vmatprep.subr.mxu0 0.0
    %105 = vmatpush1.msra.mxu0 0.0
    %106 = vmatprep.mubr.f32.mxu0 0.0
    %107 = vmatmul.mubr.f32.gmra.mrb[0].mxu0 %v35
    %v108 = vpop.f32.mrb[0].mxu0
    %v109 = vadd.f32 0.0, %v108
    %v110 = vpop.f32.mrb[0].mxu0
    %v111 = vadd.f32 0.0, %v110
    %112 = vdwg.mxu0
    %v113 = vlaneseq
    %v114 = vand.u32 %v113, 127
    %v115 = vadd.s32 %v114, 128
    %v116 = vcvt.s32.f32 %v114
    %v117 = vcvt.s32.f32 %v115
    %vm118 = vcmp.eq.f32.partialorder %v109, %v116
    %vm119 = vcmp.eq.f32.partialorder %v111, %v117
    %v120 = vsel %vm118, 1, 0
    %v121 = vsel %vm119, 1, 0
    %v122 = vcvt.s32.f32 %v120
    %v123 = vcvt.s32.f32 %v121
    %v124 = vld [vmem:[#allocation2] sm:$0xff]
    %v125 = vld [vmem:[#allocation2 + $0x8] sm:$0xff]
    %v126 = vld [vmem:[#allocation2 + $0x10] sm:$0xff]
    %v127 = vld [vmem:[#allocation2 + $0x18] sm:$0xff]
    %v128 = vld [vmem:[#allocation2 + $0x20] sm:$0xff]
    %v129 = vld [vmem:[#allocation2 + $0x28] sm:$0xff]
    %v130 = vld [vmem:[#allocation2 + $0x30] sm:$0xff]
    %v131 = vld [vmem:[#allocation2 + $0x38] sm:$0xff]
    %v132 = vld [vmem:[#allocation2 + $0x40] sm:$0xff]
    %v133 = vld [vmem:[#allocation2 + $0x48] sm:$0xff]
    %v134 = vld [vmem:[#allocation2 + $0x50] sm:$0xff]
    %v135 = vld [vmem:[#allocation2 + $0x58] sm:$0xff]
    %v136 = vld [vmem:[#allocation2 + $0x60] sm:$0xff]
    %v137 = vld [vmem:[#allocation2 + $0x68] sm:$0xff]
    %v138 = vld [vmem:[#allocation2 + $0x70] sm:$0xff]
    %v139 = vld [vmem:[#allocation2 + $0x78] sm:$0xff]
    %v140 = vld [vmem:[#allocation2 + $0x80] sm:$0xff]
    %v141 = vld [vmem:[#allocation2 + $0x88] sm:$0xff]
    %v142 = vld [vmem:[#allocation2 + $0x90] sm:$0xff]
    %v143 = vld [vmem:[#allocation2 + $0x98] sm:$0xff]
    %v144 = vld [vmem:[#allocation2 + $0xa0] sm:$0xff]
    %v145 = vld [vmem:[#allocation2 + $0xa8] sm:$0xff]
    %v146 = vld [vmem:[#allocation2 + $0xb0] sm:$0xff]
    %v147 = vld [vmem:[#allocation2 + $0xb8] sm:$0xff]
    %v148 = vld [vmem:[#allocation2 + $0xc0] sm:$0xff]
    %v149 = vld [vmem:[#allocation2 + $0xc8] sm:$0xff]
    %v150 = vld [vmem:[#allocation2 + $0xd0] sm:$0xff]
    %v151 = vld [vmem:[#allocation2 + $0xd8] sm:$0xff]
    %v152 = vld [vmem:[#allocation2 + $0xe0] sm:$0xff]
    %v153 = vld [vmem:[#allocation2 + $0xe8] sm:$0xff]
    %v154 = vld [vmem:[#allocation2 + $0xf0] sm:$0xff]
    %v155 = vld [vmem:[#allocation2 + $0xf8] sm:$0xff]
    %156 = vmatprep.subr.mxu0 0.0
    %157 = vmatpush1.msra.mxu0 %v124
    %158 = vmatprep.subr.mxu0 0.0
    %159 = vmatpush1.msra.mxu0 %v125
    %160 = vmatprep.subr.mxu0 0.0
    %161 = vmatpush1.msra.mxu0 %v126
    %162 = vmatprep.subr.mxu0 0.0
    %163 = vmatpush1.msra.mxu0 %v127
    %164 = vmatprep.subr.mxu0 0.0
    %165 = vmatpush1.msra.mxu0 %v128
    %166 = vmatprep.subr.mxu0 0.0
    %167 = vmatpush1.msra.mxu0 %v129
    %168 = vmatprep.subr.mxu0 0.0
    %169 = vmatpush1.msra.mxu0 %v130
    %170 = vmatprep.subr.mxu0 0.0
    %171 = vmatpush1.msra.mxu0 %v131
    %172 = vmatprep.subr.mxu0 0.0
    %173 = vmatpush1.msra.mxu0 %v132
    %174 = vmatprep.subr.mxu0 0.0
    %175 = vmatpush1.msra.mxu0 %v133
    %176 = vmatprep.subr.mxu0 0.0
    %177 = vmatpush1.msra.mxu0 %v134
    %178 = vmatprep.subr.mxu0 0.0
    %179 = vmatpush1.msra.mxu0 %v135
    %180 = vmatprep.subr.mxu0 0.0
    %181 = vmatpush1.msra.mxu0 %v136
    %182 = vmatprep.subr.mxu0 0.0
    %183 = vmatpush1.msra.mxu0 %v137
    %184 = vmatprep.subr.mxu0 0.0
    %185 = vmatpush1.msra.mxu0 %v138
    %186 = vmatprep.subr.mxu0 0.0
    %187 = vmatpush1.msra.mxu0 %v139
    %188 = vmatprep.subr.mxu0 0.0
    %189 = vmatpush1.msra.mxu0 %v140
    %190 = vmatprep.subr.mxu0 0.0
    %191 = vmatpush1.msra.mxu0 %v141
    %192 = vmatprep.subr.mxu0 0.0
    %193 = vmatpush1.msra.mxu0 %v142
    %194 = vmatprep.subr.mxu0 0.0
    %195 = vmatpush1.msra.mxu0 %v143
    %196 = vmatprep.subr.mxu0 0.0
    %197 = vmatpush1.msra.mxu0 %v144
    %198 = vmatprep.subr.mxu0 0.0
    %199 = vmatpush1.msra.mxu0 %v145
    %200 = vmatprep.subr.mxu0 0.0
    %201 = vmatpush1.msra.mxu0 %v146
    %202 = vmatprep.subr.mxu0 0.0
    %203 = vmatpush1.msra.mxu0 %v147
    %204 = vmatprep.subr.mxu0 0.0
    %205 = vmatpush1.msra.mxu0 %v148
    %206 = vmatprep.subr.mxu0 0.0
    %207 = vmatpush1.msra.mxu0 %v149
    %208 = vmatprep.subr.mxu0 0.0
    %209 = vmatpush1.msra.mxu0 %v150
    %210 = vmatprep.subr.mxu0 0.0
    %211 = vmatpush1.msra.mxu0 %v151
    %212 = vmatprep.subr.mxu0 0.0
    %213 = vmatpush1.msra.mxu0 %v152
    %214 = vmatprep.subr.mxu0 0.0
    %215 = vmatpush1.msra.mxu0 %v153
    %216 = vmatprep.subr.mxu0 0.0
    %217 = vmatpush1.msra.mxu0 %v154
    %218 = vmatprep.subr.mxu0 0.0
    %219 = vmatpush1.msra.mxu0 %v155
    %220 = vmatprep.mubr.f32.mxu0 %v123
    %221 = vmatmul.mubr.f32.gmra.mrb[0].mxu0 %v122
    %v222 = vpop.f32.mrb[0].mxu0
    %v223 = vadd.f32 0.0, %v222
    %v224 = vpop.f32.mrb[0].mxu0
    %225 = vdwg.mxu0
    %226 = vst [vmem:[#allocation5] sm:$0xff] %v223
    // Predicated region
    $region18: #{tpu_custom_call.1} parent=1 // pred_check
      _
    $region19: #{tpu_custom_call.1} parent=1 // pred_check_branch
      %228 = sbr.rel (0) target = $region21
    $region20: #{tpu_custom_call.1} parent=1 // pred_region
      %s230 = ssub.s32 128, 128
      %231 = vsyncadd [#allocation4], %s230
      %s233 = sshll.u32 [#allocation5], 4
      %s234 = int_to_ptr.vmem [resolvable:$true] %s233
      %236 = dma.vmem_to_hbm [thread:$0]  %s234, 128, %s3, [#allocation4]
    $region21: #{tpu_custom_call.1} parent=1 // pred_fallthru
      _
    // Predicated region
    $region22: #{tpu_custom_call.1} parent=1 // pred_check
      _
    $region23: #{tpu_custom_call.1} parent=1 // pred_check_branch
      %238 = sbr.rel (0) target = $region25
    $region24: #{tpu_custom_call.1} parent=1 // pred_region
      %239 = dma.done [#allocation4], 128
    $region25: #{tpu_custom_call.1} parent=1 // pred_fallthru
      _
    %240 = vsyncpa [#allocation3], 1
    %241 = vsyncpa [#allocation4], 1

</llo_original>
